<compile_context>
chip_gen: v5e
topology: v5e:2x2
jax: 0.10.0
libtpu: 0.0.40
codegen_flags: <defaults>
</compile_context>

<pallas_src>
import jax
import jax.numpy as jnp
from jax.experimental import pallas as pl
from jax.experimental.pallas import tpu as pltpu

_SUB = 8          # f32 sublanes per vreg
_LANE = 128       # lanes per vreg
_TARGET_BLOCK_BYTES = 4 * 1024 * 1024    # ~4 MiB per input buffer (x2 double-buffered)
_VMEM_LIMIT_BYTES = 32 * 1024 * 1024     # covers 2 buffers + pipeline headroom on all gens
_XLA_SMALL_THRESHOLD = 1 << 16           # below this a fused XLA reduction wins


def _sublane_multiple(dtype):
    """Native packed-sublane row multiple: 8 (f32), 16 (bf16/f16), 32 (8-bit)."""
    itemsize = jnp.dtype(dtype).itemsize
    return _SUB * max(1, 4 // itemsize)


def _cores_per_chip():
    """1 on single-TensorCore parts (v5e/v6e); 2 on multi-core parts.

    Mis-detection is benign: too many splits only wastes one clamped block,
    too few only loses the optional cross-core sharding.
    """
    try:
        kind = jax.devices()[0].device_kind.lower()
    except Exception:
        return 1
    if "lite" in kind or "v5e" in kind or "v6e" in kind or "v6 lite" in kind:
        return 1
    if any(m in kind for m in ("v7", "v5p", "v4", "v3", "v2")):
        return 2
    return 1


def _make_loss_kernel(valid_rows, block_rows, blocks_per_split):
    """Partial-sum kernel for relu(1 + x) over a (rows, 128) view.

    Grid = (num_splits, blocks_per_split).  Leading axis is 'parallel'
    (sharded across TensorCores on multi-core parts); trailing axis is the
    reduction over row-blocks.  Each split accumulates into its own resident
    (8, 128) f32 output block; the cross-lane reduce happens in the wrapper.
    """

    def kernel(x_ref, acc_ref):
        c = pl.program_id(0)
        i = pl.program_id(1)

        @pl.when(i == 0)
        def _():
            acc_ref[...] = jnp.zeros_like(acc_ref)

        # Logical (unclamped) block index -> first global row of this block.
        blk = c * blocks_per_split + i
        row0 = blk * block_rows

        def partial_sum(t):
            # (block_rows, 128) -> (block_rows//8, 8, 128) regroups whole
            # vregs; the axis-0 sum is plain VPU adds hidden under the DMA.
            return t.reshape(block_rows // _SUB, _SUB, _LANE).sum(axis=0)

        # Fast path: fully-interior block -- no iota / where, stays DMA-bound.
        @pl.when(row0 + block_rows <= valid_rows)
        def _():
            x = x_ref[...].astype(jnp.float32)
            acc_ref[...] += partial_sum(jnp.maximum(x + 1.0, 0.0))

        # Slow path: last (partial) block of the array, or an over-covered
        # clamped block from a split that ran past the end (contributes 0).
        # Garbage rows past `valid_rows` are zeroed before accumulation.
        @pl.when(row0 + block_rows > valid_rows)
        def _():
            row_ids = row0 + jax.lax.broadcasted_iota(
                jnp.int32, (block_rows, _LANE), 0)
            x = x_ref[...].astype(jnp.float32)
            t = jnp.maximum(x + 1.0, 0.0)
            acc_ref[...] += partial_sum(jnp.where(row_ids < valid_rows, t, 0.0))

    return kernel


def loss_dsc_fake(rhat, *, block_rows=None, num_splits=None, force_kernel=False):
    """JAX/Pallas equivalent of LossDSCfake().forward(rhat) = relu(1 + rhat).mean()."""
    n = rhat.size
    flat = rhat.reshape(-1)

    min_rows = _sublane_multiple(rhat.dtype)
    itemsize = jnp.dtype(rhat.dtype).itemsize

    # 128-aligned prefix goes through the kernel; <128-element lane tail is a
    # tiny fused XLA reduce added back at the end (no jnp.pad full-array copy).
    n_main = (n // _LANE) * _LANE
    rows = n_main // _LANE

    # Tiny inputs (or not even one native tile of rows): let XLA fuse it.
    if (not force_kernel and n < _XLA_SMALL_THRESHOLD) or rows < min_rows:
        return jnp.mean(jnp.maximum(1.0 + flat.astype(jnp.float32), 0.0))

    # ~4 MiB per buffer, dtype-aware row multiple, never larger than the array.
    if block_rows is None:
        block_rows = _TARGET_BLOCK_BYTES // (_LANE * itemsize)
    block_rows = max(min_rows, min(block_rows, (rows // min_rows) * min_rows))
    block_rows = (block_rows // min_rows) * min_rows

    num_blocks = pl.cdiv(rows, block_rows)
    if num_splits is None:
        num_splits = _cores_per_chip()
    num_splits = max(1, min(int(num_splits), num_blocks))
    blocks_per_split = pl.cdiv(num_blocks, num_splits)

    # Lane-aligned case: free reshape (bitcast), zero wrapper copies.
    # Unaligned case: only the aligned prefix is streamed (review option (b)).
    x2 = (flat if n_main == n else flat[:n_main]).reshape(rows, _LANE)

    def x_index_map(c, i):
        blk = c * blocks_per_split + i
        # Clamp so splits whose range over-covers the array never issue an
        # out-of-range block DMA; the kernel masks their contribution to zero.
        return (jnp.minimum(blk, num_blocks - 1), 0)

    cost = pl.CostEstimate(
        flops=int(2 * n_main),
        transcendentals=0,
        bytes_accessed=int(n_main * itemsize + num_splits * _SUB * _LANE * 4),
    )

    partials = pl.pallas_call(
        _make_loss_kernel(rows, block_rows, blocks_per_split),
        out_shape=jax.ShapeDtypeStruct((num_splits, _SUB, _LANE), jnp.float32),
        grid_spec=pltpu.PrefetchScalarGridSpec(
            num_scalar_prefetch=0,
            grid=(num_splits, blocks_per_split),
            in_specs=[pl.BlockSpec((block_rows, _LANE), x_index_map)],
            out_specs=pl.BlockSpec((None, _SUB, _LANE), lambda c, i: (c, 0, 0)),
        ),
        compiler_params=pltpu.CompilerParams(
            dimension_semantics=("parallel", "arbitrary"),
            vmem_limit_bytes=_VMEM_LIMIT_BYTES,
        ),
        cost_estimate=cost,
    )(x2)

    total = jnp.sum(partials, dtype=jnp.float32)
    if n_main < n:
        tail = flat[n_main:]
        total = total + jnp.sum(jnp.maximum(1.0 + tail.astype(jnp.float32), 0.0))

    # Mean over the ORIGINAL element count.
    return total / jnp.float32(n)


def _reference(rhat):
    return jnp.mean(jnp.maximum(1.0 + rhat.astype(jnp.float32), 0.0))


if __name__ == "__main__":
    key = jax.random.PRNGKey(0)
    k0, k1, k2 = jax.random.split(key, 3)

    # Primary small example consistent with a discriminator output map.
    rhat = jax.random.normal(k0, (2, 4, 16, 16), dtype=jnp.float32)
    out = jax.block_until_ready(loss_dsc_fake(rhat, force_kernel=True))
    ref = _reference(rhat)
    assert jnp.allclose(out, ref, rtol=1e-6, atol=1e-6), (out, ref)

    # Non-lane-aligned bf16 input: exercises slice-free lane tail, partial last
    # block mask (slow path) and the in-kernel upcast.
    rhat2 = jax.random.normal(k1, (3, 7, 33, 33), dtype=jnp.bfloat16)
    out2 = jax.block_until_ready(loss_dsc_fake(rhat2, force_kernel=True))
    ref2 = _reference(rhat2)
    assert jnp.allclose(out2, ref2, rtol=1e-5, atol=1e-5), (out2, ref2)

    # Multi-block unaligned f32 input: exercises fast-path interior block +
    # masked final block + lane tail together.
    rhat3 = jax.random.normal(k2, (2, 4, 129, 67), dtype=jnp.float32)
    out3 = jax.block_until_ready(loss_dsc_fake(rhat3, force_kernel=True))
    ref3 = _reference(rhat3)
    assert jnp.allclose(out3, ref3, rtol=1e-5, atol=1e-5), (out3, ref3)

    print("KERNEL_OK")
</pallas_src>

<mosaic_0001>
module attributes {stable_mosaic.version = 11 : i64} {
  func.func @kernel(%arg0: i32, %arg1: i32, %arg2: memref<16x128xf32, #tpu.memory_space<vmem>>, %arg3: memref<1x8x128xf32, #tpu.memory_space<vmem>>) attributes {dimension_semantics = [#tpu.dimension_semantics<parallel>, #tpu.dimension_semantics<arbitrary>], iteration_bounds = array<i64: 1, 1>, scalar_prefetch = 0 : i64, scratch_operands = 0 : i64, tpu.core_type = #tpu.core_type<tc>, window_params = [{transform_indices = @transform_0, window_bounds = array<i64: 16, 128>}, {transform_indices = @transform_1, window_bounds = array<i64: 1, 8, 128>}]} {
    %c0_i32 = arith.constant 0 : i32
    %0 = arith.cmpi eq, %arg1, %c0_i32 : i32
    %1 = arith.extui %0 : i1 to i32
    %c0_i32_0 = arith.constant 0 : i32
    %2 = arith.cmpi ne, %1, %c0_i32_0 : i32
    scf.if %2 {
      %cst = arith.constant 0.000000e+00 : f32
      %14 = vector.broadcast %cst : f32 to vector<8x128xf32>
      %c0 = arith.constant 0 : index
      %c0_7 = arith.constant 0 : index
      %c0_8 = arith.constant 0 : index
      %15 = vector.load %arg3[%c0, %c0_7, %c0_8] : memref<1x8x128xf32, #tpu.memory_space<vmem>>, vector<1x8x128xf32>
      %16 = vector.shape_cast %15 : vector<1x8x128xf32> to vector<8x128xf32>
      %17 = vector.shape_cast %14 : vector<8x128xf32> to vector<1x8x128xf32>
      tpu.vector_store %arg3[%c0, %c0_7, %c0_8], %17 {strides = array<i32>} : memref<1x8x128xf32, #tpu.memory_space<vmem>>, vector<1x8x128xf32>,
    } else {
    }
    %c1_i32 = arith.constant 1 : i32
    %3 = arith.muli %arg0, %c1_i32 : i32
    %4 = arith.addi %3, %arg1 : i32
    %c16_i32 = arith.constant 16 : i32
    %5 = arith.muli %4, %c16_i32 : i32
    %c16_i32_1 = arith.constant 16 : i32
    %6 = arith.addi %5, %c16_i32_1 : i32
    %c16_i32_2 = arith.constant 16 : i32
    %7 = arith.cmpi sle, %6, %c16_i32_2 : i32
    %8 = arith.extui %7 : i1 to i32
    %c0_i32_3 = arith.constant 0 : i32
    %9 = arith.cmpi ne, %8, %c0_i32_3 : i32
    scf.if %9 {
      %c0 = arith.constant 0 : index
      %c0_7 = arith.constant 0 : index
      %14 = vector.load %arg2[%c0, %c0_7] : memref<16x128xf32, #tpu.memory_space<vmem>>, vector<16x128xf32>
      %c0_8 = arith.constant 0 : index
      %c0_9 = arith.constant 0 : index
      %c0_10 = arith.constant 0 : index
      %15 = vector.load %arg3[%c0_8, %c0_9, %c0_10] : memref<1x8x128xf32, #tpu.memory_space<vmem>>, vector<1x8x128xf32>
      %16 = vector.shape_cast %15 : vector<1x8x128xf32> to vector<8x128xf32>
      %cst = arith.constant 1.000000e+00 : f32
      %17 = vector.broadcast %cst : f32 to vector<16x128xf32>
      %18 = arith.addf %14, %17 : vector<16x128xf32>
      %cst_11 = arith.constant 0.000000e+00 : f32
      %19 = vector.broadcast %cst_11 : f32 to vector<16x128xf32>
      %20 = arith.maximumf %18, %19 : vector<16x128xf32>
      %21 = vector.shape_cast %20 : vector<16x128xf32> to vector<2x8x128xf32>
      %cst_12 = arith.constant dense<0.000000e+00> : vector<8x128xf32>
      %22 = vector.multi_reduction <add>, %21, %cst_12 [0] : vector<2x8x128xf32> to vector<8x128xf32>
      %23 = arith.addf %16, %22 : vector<8x128xf32>
      %c0_13 = arith.constant 0 : index
      %c0_14 = arith.constant 0 : index
      %c0_15 = arith.constant 0 : index
      %24 = vector.load %arg3[%c0_13, %c0_14, %c0_15] : memref<1x8x128xf32, #tpu.memory_space<vmem>>, vector<1x8x128xf32>
      %25 = vector.shape_cast %24 : vector<1x8x128xf32> to vector<8x128xf32>
      %26 = vector.shape_cast %23 : vector<8x128xf32> to vector<1x8x128xf32>
      tpu.vector_store %arg3[%c0_13, %c0_14, %c0_15], %26 {strides = array<i32>} : memref<1x8x128xf32, #tpu.memory_space<vmem>>, vector<1x8x128xf32>,
    } else {
    }
    %c16_i32_4 = arith.constant 16 : i32
    %10 = arith.addi %5, %c16_i32_4 : i32
    %c16_i32_5 = arith.constant 16 : i32
    %11 = arith.cmpi sgt, %10, %c16_i32_5 : i32
    %12 = arith.extui %11 : i1 to i32
    %c0_i32_6 = arith.constant 0 : i32
    %13 = arith.cmpi ne, %12, %c0_i32_6 : i32
    scf.if %13 {
      %14 = tpu.iota {dimensions = array<i32: 0>} : vector<16x128xi32>
      %15 = vector.broadcast %5 : i32 to vector<16x128xi32>
      %16 = arith.addi %15, %14 : vector<16x128xi32>
      %c0 = arith.constant 0 : index
      %c0_7 = arith.constant 0 : index
      %17 = vector.load %arg2[%c0, %c0_7] : memref<16x128xf32, #tpu.memory_space<vmem>>, vector<16x128xf32>
      %cst = arith.constant 1.000000e+00 : f32
      %18 = vector.broadcast %cst : f32 to vector<16x128xf32>
      %19 = arith.addf %17, %18 : vector<16x128xf32>
      %cst_8 = arith.constant 0.000000e+00 : f32
      %20 = vector.broadcast %cst_8 : f32 to vector<16x128xf32>
      %21 = arith.maximumf %19, %20 : vector<16x128xf32>
      %c0_9 = arith.constant 0 : index
      %c0_10 = arith.constant 0 : index
      %c0_11 = arith.constant 0 : index
      %22 = vector.load %arg3[%c0_9, %c0_10, %c0_11] : memref<1x8x128xf32, #tpu.memory_space<vmem>>, vector<1x8x128xf32>
      %23 = vector.shape_cast %22 : vector<1x8x128xf32> to vector<8x128xf32>
      %c16_i32_12 = arith.constant 16 : i32
      %24 = vector.broadcast %c16_i32_12 : i32 to vector<16x128xi32>
      %25 = arith.cmpi slt, %16, %24 : vector<16x128xi32>
      %cst_13 = arith.constant 0.000000e+00 : f32
      %26 = vector.broadcast %cst_13 : f32 to vector<16x128xf32>
      %27 = arith.select %25, %21, %26 : vector<16x128xi1>, vector<16x128xf32>
      %28 = vector.shape_cast %27 : vector<16x128xf32> to vector<2x8x128xf32>
      %cst_14 = arith.constant dense<0.000000e+00> : vector<8x128xf32>
      %29 = vector.multi_reduction <add>, %28, %cst_14 [0] : vector<2x8x128xf32> to vector<8x128xf32>
      %30 = arith.addf %23, %29 : vector<8x128xf32>
      %c0_15 = arith.constant 0 : index
      %c0_16 = arith.constant 0 : index
      %c0_17 = arith.constant 0 : index
      %31 = vector.load %arg3[%c0_15, %c0_16, %c0_17] : memref<1x8x128xf32, #tpu.memory_space<vmem>>, vector<1x8x128xf32>
      %32 = vector.shape_cast %31 : vector<1x8x128xf32> to vector<8x128xf32>
      %33 = vector.shape_cast %30 : vector<8x128xf32> to vector<1x8x128xf32>
      tpu.vector_store %arg3[%c0_15, %c0_16, %c0_17], %33 {strides = array<i32>} : memref<1x8x128xf32, #tpu.memory_space<vmem>>, vector<1x8x128xf32>,
    } else {
    }
    return
  }
  func.func @transform_0(%arg0: i32, %arg1: i32) -> (i32, i32) {
    %c1_i32 = arith.constant 1 : i32
    %0 = arith.muli %arg0, %c1_i32 : i32
    %1 = arith.addi %0, %arg1 : i32
    %c0_i32 = arith.constant 0 : i32
    %2 = arith.minsi %1, %c0_i32 : i32
    %c0_i32_0 = arith.constant 0 : i32
    %c0_i32_1 = arith.constant 0 : i32
    return %2, %c0_i32_0 : i32, i32
  }
  func.func @transform_1(%arg0: i32, %arg1: i32) -> (i32, i32, i32) {
    %c0_i32 = arith.constant 0 : i32
    %c0_i32_0 = arith.constant 0 : i32
    %c0_i32_1 = arith.constant 0 : i32
    return %arg0, %c0_i32, %c0_i32_0 : i32, i32, i32
  }
}

</mosaic_0001>

<llo_original>
// kernel: tpu_custom_call.1
$region0: #{tpu_custom_call.1}
  #allocation0 [shape = 'u32[]', space=smem, size = 0x4, offset = 0x4, fixed_abs, tag = 'smem constant byte address 0x4 - core index']
  #allocation1 [shape = 'u32[72,128]{1,0:T(1,128)}', space=vmem, size = 0x9000, scoped, tag = 'internal scratch']
  %s0 = inlined_call_operand.hbm [shape: f32[16,128], index: 0, kind: input, shape index: {}]
  %s1 = inlined_call_operand.hbm [shape: f32[1,8,128], index: 1, kind: output, shape index: {}]
  %s2 = sld [smem:[#allocation0]]
  $region30: #{tpu_custom_call.1} parent=0
    _
  %s4 = ssub.s32 1, %s2
  %s5 = scalar_select 0, %s4, %s2
  $region1: #{tpu_custom_call.1} parent=0
    #allocation2 [shape = 'u8[8192]{0}', space=vmem, size = 0x2000, scoped, tag = 'input window, operand 0, single buffered']
    #allocation3 [shape = 's32[1]{0}', space=sflag, size = 0x4, scoped, tag = 'scoped memory for tpu_custom_call.1']
    #allocation4 [shape = 's32[1]{0}', space=sflag, size = 0x4, scoped, tag = 'scoped memory for tpu_custom_call.1']
    #allocation5 [shape = 'u8[4096]{0}', space=vmem, size = 0x1000, scoped, tag = 'output window, operand 0, single buffered']
    %6 = vsyncpa [#allocation3], 0
    %7 = vsyncpa [#allocation4], 0
    // Predicated region
    $region2: #{tpu_custom_call.1} parent=1 // pred_check
      _
    $region3: #{tpu_custom_call.1} parent=1 // pred_check_branch
      %9 = sbr.rel (0) target = $region5
    $region4: #{tpu_custom_call.1} parent=1 // pred_region
      %s10 = sadd.s32 0, 0
      %p11 = scmp.lt.s32.totalorder %s10, 0
      %s12 = scalar_select %p11, %s10, 0
      %s13 = smul.u32 2, %s12
      %15 = vsyncadd [#allocation3], 0
      %s16 = smul.addr %s13, 8
      %s17 = scalar_lea.hbm %s0, %s16
      %s18 = sshll.u32 %s17, 4
      %s19 = int_to_ptr.hbm [resolvable:$true] %s18
      %s20 = sshll.u32 [#allocation2], 4
      %s21 = int_to_ptr.vmem [resolvable:$true] %s20
      %26 = dma.hbm_to_vmem [thread:$0]  %s19, 256, %s21, [#allocation3], 128, 128, 8
    $region5: #{tpu_custom_call.1} parent=1 // pred_fallthru
      _
    // Predicated region
    $region6: #{tpu_custom_call.1} parent=1 // pred_check
      _
    $region7: #{tpu_custom_call.1} parent=1 // pred_check_branch
      %28 = sbr.rel (0) target = $region9
    $region8: #{tpu_custom_call.1} parent=1 // pred_region
      %30 = dma.done [#allocation3], 256
    $region9: #{tpu_custom_call.1} parent=1 // pred_fallthru
      _
    %s31 = sadd.s32 0, 0
    %p32 = scmp.lt.s32.totalorder %s31, 0
    %s33 = scalar_select %p32, %s31, 0
    %s34 = smul.u32 2, %s33
    %p35 = scmp.eq.s32.totalorder 0, 0
    // Predicated region
    $region10: #{tpu_custom_call.1} parent=1 // pred_check
      %p36 = pneg %p35
    $region11: #{tpu_custom_call.1} parent=1 // pred_check_branch
      %38 = sbr.rel (%p36) target = $region13
    $region12: #{tpu_custom_call.1} parent=1 // pred_region
      %39 = vst [vmem:[#allocation5] sm:$0xff] 0.0
    $region13: #{tpu_custom_call.1} parent=1 // pred_fallthru
      _
    %s40 = sadd.s32 0, 0
    %s41 = smul.u32 %s40, 16
    %s42 = sadd.s32 %s41, 16
    %p43 = scmp.le.s32.totalorder %s42, 16
    // Predicated region
    $region14: #{tpu_custom_call.1} parent=1 // pred_check
      %p44 = pneg %p43
    $region15: #{tpu_custom_call.1} parent=1 // pred_check_branch
      %46 = sbr.rel (%p44) target = $region17
    $region16: #{tpu_custom_call.1} parent=1 // pred_region
      %v47 = vld [vmem:[#allocation2] sm:$0xff]
      %v48 = vld [vmem:[#allocation2 + $0x8] sm:$0xff]
      %v49 = vld [vmem:[#allocation5] sm:$0xff]
      %v50 = vadd.f32 %v47, 1.0
      %v51 = vadd.f32 %v48, 1.0
      %v52 = vmax.f32 %v50, 0.0
      %v53 = vmax.f32 %v51, 0.0
      %v54 = vadd.f32 %v52, %v53
      %v55 = vadd.f32 %v49, %v54
      %56 = vst [vmem:[#allocation5] sm:$0xff] %v55
    $region17: #{tpu_custom_call.1} parent=1 // pred_fallthru
      _
    %p57 = scmp.gt.s32.totalorder %s42, 16
    // Predicated region
    $region18: #{tpu_custom_call.1} parent=1 // pred_check
      %p58 = pneg %p57
    $region19: #{tpu_custom_call.1} parent=1 // pred_check_branch
      %60 = sbr.rel (%p58) target = $region21
    $region20: #{tpu_custom_call.1} parent=1 // pred_region
      %v61 = vlaneseq
      %v62 = vshrl.u32 %v61, 7
      %v63 = vadd.s32 %v62, 8
      %v64 = vstv %s41
      %v65 = vadd.s32 %v64, %v62
      %v66 = vadd.s32 %v64, %v63
      %v67 = vld [vmem:[#allocation2] sm:$0xff]
      %v68 = vld [vmem:[#allocation2 + $0x8] sm:$0xff]
      %v69 = vadd.f32 %v67, 1.0
      %v70 = vadd.f32 %v68, 1.0
      %v71 = vmax.f32 %v69, 0.0
      %v72 = vmax.f32 %v70, 0.0
      %v73 = vld [vmem:[#allocation5] sm:$0xff]
      %vm74 = vcmp.lt.s32.totalorder %v65, 16
      %vm75 = vcmp.lt.s32.totalorder %v66, 16
      %v76 = vsel %vm74, %v71, 0.0
      %v77 = vsel %vm75, %v72, 0.0
      %v78 = vadd.f32 %v76, %v77
      %v79 = vadd.f32 %v73, %v78
      %80 = vst [vmem:[#allocation5] sm:$0xff] %v79
    $region21: #{tpu_custom_call.1} parent=1 // pred_fallthru
      _
    // Predicated region
    $region22: #{tpu_custom_call.1} parent=1 // pred_check
      _
    $region23: #{tpu_custom_call.1} parent=1 // pred_check_branch
      %82 = sbr.rel (0) target = $region25
    $region24: #{tpu_custom_call.1} parent=1 // pred_region
      %84 = vsyncadd [#allocation4], 0
      %s86 = sshll.u32 [#allocation5], 4
      %s87 = int_to_ptr.vmem [resolvable:$true] %s86
      %s88 = sshll.u32 %s1, 4
      %s89 = int_to_ptr.hbm [resolvable:$true] %s88
      %91 = dma.vmem_to_hbm [thread:$0]  %s87, 128, %s89, [#allocation4]
    $region25: #{tpu_custom_call.1} parent=1 // pred_fallthru
      _
    // Predicated region
    $region26: #{tpu_custom_call.1} parent=1 // pred_check
      _
    $region27: #{tpu_custom_call.1} parent=1 // pred_check_branch
      %93 = sbr.rel (0) target = $region29
    $region28: #{tpu_custom_call.1} parent=1 // pred_region
      %95 = dma.done [#allocation4], 128
    $region29: #{tpu_custom_call.1} parent=1 // pred_fallthru
      _
    %96 = vsyncpa [#allocation3], 1
    %97 = vsyncpa [#allocation4], 1

</llo_original>
